<compile_context>
chip_gen: v7x
topology: tpu7x:2x2x1
jax: 0.10.0
libtpu: 0.0.40
codegen_flags: <defaults>
</compile_context>

<pallas_src>
from functools import partial

import jax
import jax.numpy as jnp
from jax.experimental import pallas as pl
from jax.experimental.pallas import tpu as pltpu


def _round_up(x, m):
    return (x + m - 1) // m * m


# ----------------------------------------------------------------------------
# Kernel 1: slot-wise FC  -- feat_dst = bmm(h_src, fc), tiled over N
#   h : (num_ntype, N, in_feats)   fc : (num_ntype, in_feats, H*out_feats)
# ----------------------------------------------------------------------------
def _slot_fc_kernel(h_ref, w_ref, o_ref):
    o_ref[0] = jnp.dot(h_ref[0], w_ref[0], preferred_element_type=jnp.float32)


def slot_fc(h, w, block_n=512):
    T, N, Fin = h.shape
    Fout = w.shape[-1]
    tn = min(block_n, N)
    Np = _round_up(N, tn)
    if Np != N:
        h = jnp.pad(h, ((0, 0), (0, Np - N), (0, 0)))

    out = pl.pallas_call(
        _slot_fc_kernel,
        out_shape=jax.ShapeDtypeStruct((T, Np, Fout), jnp.float32),
        grid=(T, Np // tn),
        in_specs=[
            pl.BlockSpec((1, tn, Fin), lambda t, n: (t, n, 0)),
            pl.BlockSpec((1, Fin, Fout), lambda t, n: (t, 0, 0)),
        ],
        out_specs=pl.BlockSpec((1, tn, Fout), lambda t, n: (t, n, 0)),
        compiler_params=pltpu.CompilerParams(
            dimension_semantics=("parallel", "parallel"),
            vmem_limit_bytes=32 * 1024 * 1024),
    )(h, w)
    return out[:, :N]


# ----------------------------------------------------------------------------
# Kernel 2: flash-style tiled masked edge-softmax + aggregation, per head.
#   grid = (H, n_dst_tiles, n_src_tiles); the src axis is the online-softmax
#   reduction.  Outputs: rst (H,N,D), plus per-dst-row max m and denom l so the
#   wrapper can recompute the E per-edge attention values without a dense
#   (H,N,N) writeback.
# ----------------------------------------------------------------------------
def _flash_attn_kernel(ft_ref, el_ref, er_ref, ee_ref, adj_ref,
                       rst_ref, m_ref, l_ref,
                       m_sc, l_sc, acc_sc, *, negative_slope):
    ki = pl.program_id(2)

    @pl.when(ki == 0)
    def _():
        m_sc[...] = jnp.full(m_sc.shape, -1e30, dtype=jnp.float32)
        l_sc[...] = jnp.zeros(l_sc.shape, dtype=jnp.float32)
        acc_sc[...] = jnp.zeros(acc_sc.shape, dtype=jnp.float32)

    ft = ft_ref[0]                                  # (Tk, D)  source features
    el = el_ref[0]                                  # (1, Tk)  per-src logit
    er = er_ref[0]                                  # (Tq, 1)  per-dst logit
    ee = ee_ref[0]                                  # (Tq, Tk) edge-type logit
    adjf = adj_ref[...].astype(jnp.float32)         # (Tq, Tk) 0/1 mask

    e = er + el + ee                                # u_add_v + ee
    e = jnp.where(e >= 0, e, negative_slope * e)    # leaky_relu

    masked = jnp.where(adjf > 0, e, -1e30)
    blk_max = jnp.max(masked, axis=-1, keepdims=True)
    m_new = jnp.maximum(m_sc[...], blk_max)
    alpha = jnp.exp(m_sc[...] - m_new)
    p = jnp.exp(masked - m_new) * adjf              # exact zero on non-edges

    l_sc[...] = alpha * l_sc[...] + jnp.sum(p, axis=-1, keepdims=True)
    acc_sc[...] = alpha * acc_sc[...] + jnp.dot(
        p, ft, preferred_element_type=jnp.float32)
    m_sc[...] = m_new

    @pl.when(ki == pl.num_programs(2) - 1)
    def _():
        l = l_sc[...]
        l_safe = jnp.where(l > 0, l, 1.0)
        # normalize after aggregation (reciprocal on EUP; exact variant to keep
        # 1e-4 tolerances vs. the float reference).
        rst_ref[0] = acc_sc[...] * pl.reciprocal(l_safe, approx=False)
        m_ref[0] = m_sc[...]
        l_ref[0] = l


def flash_slot_attention(ft, el, er, ee, adj, *, negative_slope=0.2,
                         block_q=256, block_k=512):
    H, N, D = ft.shape
    tq = min(block_q, N)
    tk = min(block_k, N)
    nq = pl.cdiv(N, tq)
    nk = pl.cdiv(N, tk)
    Nq = nq * tq
    Nk = nk * tk

    if Nk != N:
        ft = jnp.pad(ft, ((0, 0), (0, Nk - N), (0, 0)))
        el = jnp.pad(el, ((0, 0), (0, 0), (0, Nk - N)))
    if Nq != N:
        er = jnp.pad(er, ((0, 0), (0, Nq - N), (0, 0)))
    if Nq != N or Nk != N:
        ee = jnp.pad(ee, ((0, 0), (0, Nq - N), (0, Nk - N)))
        adj = jnp.pad(adj, ((0, Nq - N), (0, Nk - N)))

    kernel = partial(_flash_attn_kernel, negative_slope=float(negative_slope))

    rst, m, l = pl.pallas_call(
        kernel,
        out_shape=(
            jax.ShapeDtypeStruct((H, Nq, D), jnp.float32),
            jax.ShapeDtypeStruct((H, Nq, 1), jnp.float32),
            jax.ShapeDtypeStruct((H, Nq, 1), jnp.float32),
        ),
        grid=(H, nq, nk),
        in_specs=[
            pl.BlockSpec((1, tk, D), lambda h, qi, ki: (h, ki, 0)),   # ft (src)
            pl.BlockSpec((1, 1, tk), lambda h, qi, ki: (h, 0, ki)),   # el (src)
            pl.BlockSpec((1, tq, 1), lambda h, qi, ki: (h, qi, 0)),   # er (dst)
            pl.BlockSpec((1, tq, tk), lambda h, qi, ki: (h, qi, ki)),  # ee tile
            pl.BlockSpec((tq, tk), lambda h, qi, ki: (qi, ki)),        # adj tile
        ],
        out_specs=(
            pl.BlockSpec((1, tq, D), lambda h, qi, ki: (h, qi, 0)),
            pl.BlockSpec((1, tq, 1), lambda h, qi, ki: (h, qi, 0)),
            pl.BlockSpec((1, tq, 1), lambda h, qi, ki: (h, qi, 0)),
        ),
        scratch_shapes=[
            pltpu.VMEM((tq, 1), jnp.float32),   # running max
            pltpu.VMEM((tq, 1), jnp.float32),   # running denom
            pltpu.VMEM((tq, D), jnp.float32),   # unnormalized accumulator
        ],
        compiler_params=pltpu.CompilerParams(
            dimension_semantics=("parallel", "parallel", "arbitrary"),
            vmem_limit_bytes=32 * 1024 * 1024),
    )(ft, el, er, ee, adj)
    return rst, m, l


# ----------------------------------------------------------------------------
# Full forward (glue in JAX, hot path in Pallas)
# ----------------------------------------------------------------------------
def slotgat_forward(params, feat, src, dst, e_types, num_nodes,
                    negative_slope=0.2, block_q=256, block_k=512):
    fc = params["fc"]                       # (T, Fin, H*out)
    T, Fin, HT = fc.shape
    attn_l = params["attn_l"]               # (1, H, D)
    attn_r = params["attn_r"]
    H = attn_l.shape[1]
    out_feats = HT // H
    D = T * out_feats
    N = num_nodes

    # ---- inputhead=True reshape path: (N, T*Fin) -> (T, N, Fin) ----
    h = feat.reshape(N, 1, T, Fin)
    h = jnp.transpose(h, (2, 0, 1, 3)).reshape(T, N, Fin)

    # ---- slot-wise FC (Pallas kernel 1) ----
    f = slot_fc(h, fc)                                          # (T, N, H*out)
    f = jnp.transpose(f, (1, 0, 2)).reshape(N, T, H, out_feats)
    feat_src = jnp.transpose(f, (0, 2, 1, 3)).reshape(N, H, D)  # (N, H, D)

    # ---- edge-feature path (tiny gather + linear; JAX glue) ----
    e_emb = params["edge_emb"][e_types]                         # (E, ef)
    ef = e_emb.shape[-1]
    e_h = (e_emb @ params["w_e"]).reshape(-1, H, ef)            # (E, H, ef)
    ee_edge = jnp.sum(e_h * params["attn_e"], axis=-1)          # (E, H)

    # ---- node-level attention logits (cheap reductions; JAX glue) ----
    el_n = jnp.sum(feat_src * attn_l, axis=-1)                  # (N, H)
    er_n = jnp.sum(feat_src * attn_r, axis=-1)                  # (N, H)

    # ---- densify the graph (row = dst, col = src); adj kept int8 ----
    # TODO(synk): multi-edges between the same (src, dst) pair are not supported
    # by the dense formulation; a padded-CSR / scalar-prefetch kernel would also
    # remove the O(N^2) adj/ee densification for sparse graphs.
    adj = jnp.zeros((N, N), jnp.int8).at[dst, src].set(1)
    ee_dense = jnp.zeros((H, N, N), jnp.float32).at[:, dst, src].set(ee_edge.T)

    # head-major operands for the attention kernel
    ft = jnp.transpose(feat_src, (1, 0, 2))                     # (H, N, D)
    el_hm = jnp.transpose(el_n, (1, 0))[:, None, :]             # (H, 1, N)
    er_hm = jnp.transpose(er_n, (1, 0))[:, :, None]             # (H, N, 1)

    # ---- flash-style attention + aggregation (Pallas kernel 2) ----
    rst_hm, m_hm, l_hm = flash_slot_attention(
        ft, el_hm, er_hm, ee_dense, adj,
        negative_slope=negative_slope, block_q=block_q, block_k=block_k)

    rst = jnp.transpose(rst_hm[:, :N], (1, 0, 2))               # (N, H, D)

    # ---- recompute the E per-edge attentions from the row stats (no dense a) ----
    score = el_n[src] + er_n[dst] + ee_edge                     # (E, H)
    score = jnp.where(score >= 0, score, negative_slope * score)
    m_nodes = jnp.transpose(m_hm[:, :N, 0], (1, 0))             # (N, H)
    l_nodes = jnp.transpose(l_hm[:, :N, 0], (1, 0))             # (N, H)
    a_edge = jnp.exp(score - m_nodes[dst]) / l_nodes[dst]       # (E, H)
    return rst, a_edge[..., None]


# ----------------------------------------------------------------------------
# Pure-JAX edge-list reference (mirrors the DGL message passing) for checking
# ----------------------------------------------------------------------------
def slotgat_reference(params, feat, src, dst, e_types, num_nodes,
                      negative_slope=0.2):
    fc = params["fc"]
    T, Fin, HT = fc.shape
    attn_l = params["attn_l"]
    H = attn_l.shape[1]
    out_feats = HT // H
    D = T * out_feats
    N = num_nodes

    h = feat.reshape(N, 1, T, Fin)
    h = jnp.transpose(h, (2, 0, 1, 3)).reshape(T, N, Fin)
    f = jnp.einsum("tnf,tfo->tno", h, fc)
    f = jnp.transpose(f, (1, 0, 2)).reshape(N, T, H, out_feats)
    feat_src = jnp.transpose(f, (0, 2, 1, 3)).reshape(N, H, D)

    e_emb = params["edge_emb"][e_types]
    ef = e_emb.shape[-1]
    e_h = (e_emb @ params["w_e"]).reshape(-1, H, ef)
    ee = jnp.sum(e_h * params["attn_e"], axis=-1)               # (E, H)

    el = jnp.sum(feat_src * attn_l, axis=-1)                    # (N, H)
    er = jnp.sum(feat_src * params["attn_r"], axis=-1)          # (N, H)
    e = el[src] + er[dst] + ee
    e = jnp.where(e >= 0, e, negative_slope * e)
    m = jnp.full((N, H), -jnp.inf, jnp.float32).at[dst].max(e)
    p = jnp.exp(e - m[dst])
    s = jnp.zeros((N, H), jnp.float32).at[dst].add(p)
    a = p / s[dst]                                              # (E, H)
    msg = a[:, :, None] * feat_src[src]                         # (E, H, D)
    rst = jnp.zeros((N, H, D), jnp.float32).at[dst].add(msg)
    return rst, a[..., None]


# ----------------------------------------------------------------------------
def init_params(key, *, num_ntype, in_feats, out_feats, num_heads,
                edge_feats, num_etypes):
    ks = jax.random.split(key, 6)
    gain = 2.0 ** 0.5  # calculate_gain('relu')

    def xavier(k, shape, fan_in, fan_out):
        std = gain * (2.0 / (fan_in + fan_out)) ** 0.5
        return (std * jax.random.normal(k, shape)).astype(jnp.float32)

    D = out_feats * num_ntype
    return {
        "fc": xavier(ks[0], (num_ntype, in_feats, out_feats * num_heads),
                     in_feats, out_feats * num_heads),
        "attn_l": xavier(ks[1], (1, num_heads, D), num_heads, D),
        "attn_r": xavier(ks[2], (1, num_heads, D), num_heads, D),
        "attn_e": xavier(ks[3], (1, num_heads, edge_feats), num_heads, edge_feats),
        "edge_emb": (0.1 * jax.random.normal(ks[4], (num_etypes, edge_feats))
                     ).astype(jnp.float32),
        # fc_e: Linear(edge_feats, edge_feats*num_heads) stored as (in, out)
        "w_e": xavier(ks[5], (edge_feats, edge_feats * num_heads),
                      edge_feats, edge_feats * num_heads),
    }


if __name__ == "__main__":
    # small, deterministic problem
    N = 16            # nodes
    num_ntype = 3
    in_feats = 8      # per-slot input features (inputhead=True)
    out_feats = 4
    num_heads = 2
    edge_feats = 6
    num_etypes = 5

    key = jax.random.PRNGKey(0)
    kp, kf = jax.random.split(key)
    params = init_params(kp, num_ntype=num_ntype, in_feats=in_feats,
                         out_feats=out_feats, num_heads=num_heads,
                         edge_feats=edge_feats, num_etypes=num_etypes)

    feat = jax.random.normal(kf, (N, num_ntype * in_feats), dtype=jnp.float32)

    # graph: self-loops + a shifted ring (unique (src, dst) pairs)
    ids = jnp.arange(N, dtype=jnp.int32)
    src = jnp.concatenate([ids, ids])
    dst = jnp.concatenate([ids, (ids + 3) % N])
    E = src.shape[0]
    e_types = (jnp.arange(E, dtype=jnp.int32) % num_etypes)

    rst, attn = slotgat_forward(params, feat, src, dst, e_types, N)
    rst = jax.block_until_ready(rst)
    attn = jax.block_until_ready(attn)

    rst_ref, attn_ref = slotgat_reference(params, feat, src, dst, e_types, N)
    assert rst.shape == (N, num_heads, num_ntype * out_feats)
    assert attn.shape == (E, num_heads, 1)
    assert jnp.allclose(rst, rst_ref, atol=1e-4, rtol=1e-4), "rst mismatch"
    assert jnp.allclose(attn, attn_ref, atol=1e-5, rtol=1e-4), "attention mismatch"

    print("KERNEL_OK")
</pallas_src>

<mosaic_0001>
module attributes {stable_mosaic.version = 11 : i64} {
  func.func @_slot_fc_kernel(%arg0: i32, %arg1: i32, %arg2: memref<1x16x8xf32, #tpu.memory_space<vmem>>, %arg3: memref<1x8x8xf32, #tpu.memory_space<vmem>>, %arg4: memref<1x16x8xf32, #tpu.memory_space<vmem>>) attributes {dimension_semantics = [#tpu.dimension_semantics<parallel>, #tpu.dimension_semantics<parallel>], iteration_bounds = array<i64: 3, 1>, scalar_prefetch = 0 : i64, scratch_operands = 0 : i64, tpu.core_type = #tpu.core_type<tc>, window_params = [{transform_indices = @transform_0, window_bounds = array<i64: 1, 16, 8>}, {transform_indices = @transform_1, window_bounds = array<i64: 1, 8, 8>}, {transform_indices = @transform_2, window_bounds = array<i64: 1, 16, 8>}]} {
    %c0 = arith.constant 0 : index
    %c0_0 = arith.constant 0 : index
    %c0_1 = arith.constant 0 : index
    %0 = vector.load %arg2[%c0, %c0_0, %c0_1] : memref<1x16x8xf32, #tpu.memory_space<vmem>>, vector<1x16x8xf32>
    %1 = vector.shape_cast %0 : vector<1x16x8xf32> to vector<16x8xf32>
    %c0_2 = arith.constant 0 : index
    %c0_3 = arith.constant 0 : index
    %c0_4 = arith.constant 0 : index
    %2 = vector.load %arg3[%c0_2, %c0_3, %c0_4] : memref<1x8x8xf32, #tpu.memory_space<vmem>>, vector<1x8x8xf32>
    %3 = vector.shape_cast %2 : vector<1x8x8xf32> to vector<8x8xf32>
    %cst = arith.constant dense<0.000000e+00> : vector<16x8xf32>
    %4 = tpu.matmul %1, %3, %cst {dimension_numbers = #tpu.dot_dimension_numbers<[1], [0], [0], [1], [0, 0, 1, 1], [], []>} : vector<16x8xf32>, vector<8x8xf32>, vector<16x8xf32> -> vector<16x8xf32>
    %c0_5 = arith.constant 0 : index
    %c0_6 = arith.constant 0 : index
    %c0_7 = arith.constant 0 : index
    %5 = vector.load %arg4[%c0_5, %c0_6, %c0_7] : memref<1x16x8xf32, #tpu.memory_space<vmem>>, vector<1x16x8xf32>
    %6 = vector.shape_cast %5 : vector<1x16x8xf32> to vector<16x8xf32>
    %7 = vector.shape_cast %4 : vector<16x8xf32> to vector<1x16x8xf32>
    tpu.vector_store %arg4[%c0_5, %c0_6, %c0_7], %7 {strides = array<i32>} : memref<1x16x8xf32, #tpu.memory_space<vmem>>, vector<1x16x8xf32>,
    return
  }
  func.func @transform_0(%arg0: i32, %arg1: i32) -> (i32, i32, i32) {
    %c0_i32 = arith.constant 0 : i32
    %c0_i32_0 = arith.constant 0 : i32
    return %arg0, %arg1, %c0_i32 : i32, i32, i32
  }
  func.func @transform_1(%arg0: i32, %arg1: i32) -> (i32, i32, i32) {
    %c0_i32 = arith.constant 0 : i32
    %c0_i32_0 = arith.constant 0 : i32
    %c0_i32_1 = arith.constant 0 : i32
    return %arg0, %c0_i32, %c0_i32_0 : i32, i32, i32
  }
  func.func @transform_2(%arg0: i32, %arg1: i32) -> (i32, i32, i32) {
    %c0_i32 = arith.constant 0 : i32
    %c0_i32_0 = arith.constant 0 : i32
    return %arg0, %arg1, %c0_i32 : i32, i32, i32
  }
}

</mosaic_0001>

<llo_original>
// kernel: tpu_custom_call.1
$region0: #{tpu_custom_call.1}
  #allocation0 [shape = 'u32[]', space=smem, size = 0x4, offset = 0x4, fixed_abs, tag = 'smem constant byte address 0x4 - core index']
  #allocation1 [shape = 'u32[144,128]{1,0:T(1,128)}', space=vmem, size = 0x12000, scoped, tag = 'internal scratch']
  %s0 = inlined_call_operand.vmem [shape: f32[3,16,8], index: 0, kind: input, shape index: {}]
  %s1 = inlined_call_operand.vmem [shape: f32[3,8,8], index: 1, kind: input, shape index: {}]
  %s2 = inlined_call_operand.vmem [shape: f32[3,16,8], index: 2, kind: output, shape index: {}]
  %s3 = sld [smem:[#allocation0]]
  $region41: #{tpu_custom_call.1} parent=0
    _
  %s5 = ssub.s32 1, %s3
  %s6 = scalar_select 0, %s5, %s3
  loop: start=0, step=1, limit=5
  $region2: #{tpu_custom_call.1} parent=0 // loop_pre_header
    _
  $region3: #{tpu_custom_call.1} parent=0 // loop_header
    %s8 = sphi 0, %s12
    %p9 = scmp.ge.s32.totalorder %s8, 5
    %s15 = sphi 0, %s27
    %s16 = sphi 0, %s23
    %s17 = sphi 0, %s15
    %s18 = sphi 0, %s16
    %s19 = sphi 0, %s17
    %s20 = sphi 0, %s18
    %s32 = sphi 0, %s34
    %s35 = sphi 0, %s32
    %s36 = sphi 0, %s35
    %s52 = sphi 0, %s36
    %s58 = sphi 0, %s60
    %s61 = sphi 0, %s58
    %s62 = sphi 0, %s61
    %s78 = sphi 0, %s62
    %s86 = sphi 0, %s88
    %s89 = sphi 0, %s86
    %s90 = sphi 0, %s89
    %s106 = sphi 0, %s90
  $region4: #{tpu_custom_call.1} parent=0 // loop_header_branch
    %11 = sbr.rel (%p9) target = $region8
  $region5: #{tpu_custom_call.1} parent=0 // loop_body
    %s13 = ssub.s32 %s8, 1
    %s14 = ssub.s32 %s8, 2
    %s21 = sadd.s32 1, %s16
    %p22 = scmp.ge.s32.totalorder %s21, 1
    %s23 = scalar_select %p22, 0, %s21
    %s24 = sadd.s32 1, %s15
    %s25 = scalar_select %p22, %s24, %s15
    %p26 = scmp.ge.s32.totalorder %s25, 3
    %s27 = scalar_select %p26, 0, %s25
    %s28 = ssub.s32 %s15, %s27
    %s29 = ssub.s32 %s16, %s23
    %s30 = sor.u32 %s28, %s29
    %p31 = scmp.eq.s32.totalorder %s30, 0
    %s33 = sadd.s32 %s32, 1
    %s34 = scalar_select %p31, %s32, %s33
    %p37 = pneg %p31
    %p38 = scmp.eq.s32.totalorder %s8, 2
    %p39 = por %p37, %p38
    %p40 = scmp.ne.s32.totalorder %s32, %s35
    %p41 = scmp.eq.s32.totalorder %s8, 0
    %p42 = por %p40, %p41
    %p43 = scmp.ne.s32.totalorder %s32, %s35
    %p44 = scmp.eq.s32.totalorder %s13, 2
    %p45 = por %p43, %p44
    %p46 = scmp.ne.s32.totalorder %s35, %s36
    %p47 = scmp.eq.s32.totalorder %s13, 0
    %p48 = por %p46, %p47
    %p49 = scmp.ne.s32.totalorder %s35, %s36
    %p50 = scmp.eq.s32.totalorder %s14, 2
    %p51 = por %p49, %p50
    %p53 = scmp.ne.s32.totalorder %s36, %s52
    %p54 = scmp.eq.s32.totalorder %s14, 0
    %p55 = por %p53, %p54
    %s56 = ssub.s32 %s15, %s27
    %p57 = scmp.eq.s32.totalorder %s56, 0
    %s59 = sadd.s32 %s58, 1
    %s60 = scalar_select %p57, %s58, %s59
    %p63 = pneg %p57
    %p64 = scmp.eq.s32.totalorder %s8, 2
    %p65 = por %p63, %p64
    %p66 = scmp.ne.s32.totalorder %s58, %s61
    %p67 = scmp.eq.s32.totalorder %s8, 0
    %p68 = por %p66, %p67
    %p69 = scmp.ne.s32.totalorder %s58, %s61
    %p70 = scmp.eq.s32.totalorder %s13, 2
    %p71 = por %p69, %p70
    %p72 = scmp.ne.s32.totalorder %s61, %s62
    %p73 = scmp.eq.s32.totalorder %s13, 0
    %p74 = por %p72, %p73
    %p75 = scmp.ne.s32.totalorder %s61, %s62
    %p76 = scmp.eq.s32.totalorder %s14, 2
    %p77 = por %p75, %p76
    %p79 = scmp.ne.s32.totalorder %s62, %s78
    %p80 = scmp.eq.s32.totalorder %s14, 0
    %p81 = por %p79, %p80
    %s82 = ssub.s32 %s15, %s27
    %s83 = ssub.s32 %s16, %s23
    %s84 = sor.u32 %s82, %s83
    %p85 = scmp.eq.s32.totalorder %s84, 0
    %s87 = sadd.s32 %s86, 1
    %s88 = scalar_select %p85, %s86, %s87
    %p91 = pneg %p85
    %p92 = scmp.eq.s32.totalorder %s8, 2
    %p93 = por %p91, %p92
    %p94 = scmp.ne.s32.totalorder %s86, %s89
    %p95 = scmp.eq.s32.totalorder %s8, 0
    %p96 = por %p94, %p95
    %p97 = scmp.ne.s32.totalorder %s86, %s89
    %p98 = scmp.eq.s32.totalorder %s13, 2
    %p99 = por %p97, %p98
    %p100 = scmp.ne.s32.totalorder %s89, %s90
    %p101 = scmp.eq.s32.totalorder %s13, 0
    %p102 = por %p100, %p101
    %p103 = scmp.ne.s32.totalorder %s89, %s90
    %p104 = scmp.eq.s32.totalorder %s14, 2
    %p105 = por %p103, %p104
    %p107 = scmp.ne.s32.totalorder %s90, %s106
    %p108 = scmp.eq.s32.totalorder %s14, 0
    %p109 = por %p107, %p108
    %p110 = scmp.le.s32.totalorder 1, %s8
    %p111 = scmp.lt.s32.totalorder %s8, 4
    %p112 = pnand %p110, %p111
    %p113 = pneg %p112
    // Predicated region
    $region9: #{tpu_custom_call.1} parent=5 // pred_check
      _
    $region10: #{tpu_custom_call.1} parent=5 // pred_check_branch
      %115 = sbr.rel (%p112) target = $region12
    $region11: #{tpu_custom_call.1} parent=5 // pred_region
      %s116 = ssub.s32 %s8, 1
    $region12: #{tpu_custom_call.1} parent=5 // pred_fallthru
      _
    %p117 = scmp.lt.s32.totalorder %s8, 3
    // Predicated region
    $region13: #{tpu_custom_call.1} parent=5 // pred_check
      %p118 = pneg %p117
    $region14: #{tpu_custom_call.1} parent=5 // pred_check_branch
      %120 = sbr.rel (%p118) target = $region16
    $region15: #{tpu_custom_call.1} parent=5 // pred_region
      // Predicated region
      $region17: #{tpu_custom_call.1} parent=15 // pred_check
        %p121 = pneg %p42
      $region18: #{tpu_custom_call.1} parent=15 // pred_check_branch
        %123 = sbr.rel (%p121) target = $region20
      $region19: #{tpu_custom_call.1} parent=15 // pred_region
        %s124 = smul.u32 2, %s16
        %p125 = scmp.lt.s32.totalorder %s15, 2
        %s126 = scalar_select %p125, %s15, 2
        %p127 = scmp.lt.s32.totalorder %s124, 1
        %s128 = scalar_select %p127, %s124, 1
        %s129 = smul.addr %s126, 2
        %s130 = sadd.s32 %s128, %s129
        %s131 = smul.addr %s130, 8
        %s132 = scalar_lea.vmem %s0, %s131
        %s133 = smul.u32 2, %s16
      $region20: #{tpu_custom_call.1} parent=15 // pred_fallthru
        _
      // Predicated region
      $region21: #{tpu_custom_call.1} parent=15 // pred_check
        %p134 = pneg %p68
      $region22: #{tpu_custom_call.1} parent=15 // pred_check_branch
        %136 = sbr.rel (%p134) target = $region24
      $region23: #{tpu_custom_call.1} parent=15 // pred_region
        %p137 = scmp.lt.s32.totalorder %s15, 2
        %s138 = scalar_select %p137, %s15, 2
        %s139 = smul.addr %s138, 8
        %s140 = scalar_lea.vmem %s1, %s139
      $region24: #{tpu_custom_call.1} parent=15 // pred_fallthru
        _
    $region16: #{tpu_custom_call.1} parent=5 // pred_fallthru
      _
    %p141 = scmp.le.s32.totalorder 1, %s8
    %p142 = scmp.lt.s32.totalorder %s8, 4
    %p143 = pnand %p141, %p142
    %p144 = pneg %p143
    // Predicated region
    $region25: #{tpu_custom_call.1} parent=5 // pred_check
      _
    $region26: #{tpu_custom_call.1} parent=5 // pred_check_branch
      %146 = sbr.rel (%p143) target = $region28
    $region27: #{tpu_custom_call.1} parent=5 // pred_region
      %s147 = ssub.s32 %s8, 1
      %s148 = smul.u32 2, %s18
      %p149 = scmp.lt.s32.totalorder %s17, 2
      %s150 = scalar_select %p149, %s17, 2
      %p151 = scmp.lt.s32.totalorder %s148, 1
      %s152 = scalar_select %p151, %s148, 1
      %s153 = smul.addr %s150, 2
      %s154 = sadd.s32 %s152, %s153
      %s155 = smul.addr %s154, 8
      %s156 = scalar_lea.vmem %s0, %s155
      %p157 = pneg %p48
      %p158 = pneg %p45
      %p159 = scmp.lt.s32.totalorder %s17, 2
      %s160 = scalar_select %p159, %s17, 2
      %s161 = smul.addr %s160, 8
      %s162 = scalar_lea.vmem %s1, %s161
      %p163 = pneg %p74
      %p164 = pneg %p71
      %p165 = pneg %p102
      %p166 = pneg %p99
      %s167 = smul.u32 2, %s18
      %p168 = scmp.lt.s32.totalorder %s17, 2
      %s169 = scalar_select %p168, %s17, 2
      %p170 = scmp.lt.s32.totalorder %s167, 1
      %s171 = scalar_select %p170, %s167, 1
      %s172 = smul.addr %s169, 2
      %s173 = sadd.s32 %s171, %s172
      %s174 = smul.addr %s173, 8
      %s175 = scalar_lea.vmem %s2, %s174
      %s176 = smul.u32 2, %s18
      %p177 = scmp.lt.s32.totalorder %s17, 2
      %s178 = scalar_select %p177, %s17, 2
      %p179 = scmp.lt.s32.totalorder %s176, 1
      %s180 = scalar_select %p179, %s176, 1
      %s181 = smul.addr %s178, 2
      %s182 = sadd.s32 %s180, %s181
      %s183 = smul.addr %s182, 8
      %s184 = scalar_lea.vmem %s0, %s183
      %s185 = smul.u32 2, %s18
      %p186 = scmp.lt.s32.totalorder %s17, 2
      %s187 = scalar_select %p186, %s17, 2
      %s188 = smul.addr %s187, 8
      %s189 = scalar_lea.vmem %s1, %s188
      %s190 = smul.u32 2, %s18
      %p191 = scmp.lt.s32.totalorder %s17, 2
      %s192 = scalar_select %p191, %s17, 2
      %p193 = scmp.lt.s32.totalorder %s190, 1
      %s194 = scalar_select %p193, %s190, 1
      %s195 = smul.addr %s192, 2
      %s196 = sadd.s32 %s194, %s195
      %s197 = smul.addr %s196, 8
      %s198 = scalar_lea.vmem %s2, %s197
      %s199 = smul.u32 2, %s18
      %v200 = vld [vmem:[%s184] sm:$0xff]
      %v201 = vld [vmem:[%s184 + $0x8] sm:$0xff]
      %v202 = vld [vmem:[%s189] sm:$0xff]
      %vm203 = vcmask 64512
      %v205 = vsel %vm203, %v200, 0
      %v208 = vsel %vm203, %v201, 0
      %210 = vmatprep.subr.mxu0 0.0
      %211 = vmatpush1.msra.mxu0 %v202
      %212 = vmatprep.subr.mxu0 0.0
      %213 = vmatpush1.msra.mxu0 0.0
      %214 = vmatprep.subr.mxu0 0.0
      %215 = vmatpush1.msra.mxu0 0.0
      %216 = vmatprep.subr.mxu0 0.0
      %217 = vmatpush1.msra.mxu0 0.0
      %218 = vmatprep.subr.mxu0 0.0
      %219 = vmatpush1.msra.mxu0 0.0
      %220 = vmatprep.subr.mxu0 0.0
      %221 = vmatpush1.msra.mxu0 0.0
      %222 = vmatprep.subr.mxu0 0.0
      %223 = vmatpush1.msra.mxu0 0.0
      %224 = vmatprep.subr.mxu0 0.0
      %225 = vmatpush1.msra.mxu0 0.0
      %226 = vmatprep.subr.mxu0 0.0
      %227 = vmatpush1.msra.mxu0 0.0
      %228 = vmatprep.subr.mxu0 0.0
      %229 = vmatpush1.msra.mxu0 0.0
      %230 = vmatprep.subr.mxu0 0.0
      %231 = vmatpush1.msra.mxu0 0.0
      %232 = vmatprep.subr.mxu0 0.0
      %233 = vmatpush1.msra.mxu0 0.0
      %234 = vmatprep.subr.mxu0 0.0
      %235 = vmatpush1.msra.mxu0 0.0
      %236 = vmatprep.subr.mxu0 0.0
      %237 = vmatpush1.msra.mxu0 0.0
      %238 = vmatprep.subr.mxu0 0.0
      %239 = vmatpush1.msra.mxu0 0.0
      %240 = vmatprep.subr.mxu0 0.0
      %241 = vmatpush1.msra.mxu0 0.0
      %242 = vmatprep.subr.mxu0 0.0
      %243 = vmatpush1.msra.mxu0 0.0
      %244 = vmatprep.subr.mxu0 0.0
      %245 = vmatpush1.msra.mxu0 0.0
      %246 = vmatprep.subr.mxu0 0.0
      %247 = vmatpush1.msra.mxu0 0.0
      %248 = vmatprep.subr.mxu0 0.0
      %249 = vmatpush1.msra.mxu0 0.0
      %250 = vmatprep.subr.mxu0 0.0
      %251 = vmatpush1.msra.mxu0 0.0
      %252 = vmatprep.subr.mxu0 0.0
      %253 = vmatpush1.msra.mxu0 0.0
      %254 = vmatprep.subr.mxu0 0.0
      %255 = vmatpush1.msra.mxu0 0.0
      %256 = vmatprep.subr.mxu0 0.0
      %257 = vmatpush1.msra.mxu0 0.0
      %258 = vmatprep.subr.mxu0 0.0
      %259 = vmatpush1.msra.mxu0 0.0
      %260 = vmatprep.subr.mxu0 0.0
      %261 = vmatpush1.msra.mxu0 0.0
      %262 = vmatprep.subr.mxu0 0.0
      %263 = vmatpush1.msra.mxu0 0.0
      %264 = vmatprep.subr.mxu0 0.0
      %265 = vmatpush1.msra.mxu0 0.0
      %266 = vmatprep.subr.mxu0 0.0
      %267 = vmatpush1.msra.mxu0 0.0
      %268 = vmatprep.subr.mxu0 0.0
      %269 = vmatpush1.msra.mxu0 0.0
      %270 = vmatprep.subr.mxu0 0.0
      %271 = vmatpush1.msra.mxu0 0.0
      %272 = vmatprep.subr.mxu0 0.0
      %273 = vmatpush1.msra.mxu0 0.0
      %274 = vmatprep.mubr.f32.mxu0 0.0
      %275 = vmatmul.mubr.f32.gmra.mrb[0].mxu0 %v205
      %v276 = vpop.f32.mrb[0].mxu0
      %v277 = vadd.f32 0.0, %v276
      %v278 = vpop.f32.mrb[0].mxu0
      %279 = vmatprep.mubr.f32.mxu0 0.0
      %280 = vmatmul.mubr.f32.gmra.mrb[0].mxu0 %v208
      %v281 = vpop.f32.mrb[0].mxu0
      %v282 = vadd.f32 0.0, %v281
      %v283 = vpop.f32.mrb[0].mxu0
      %284 = vdwg.mxu0
      %285 = vst.msk [vmem:[%s198] sm:$0xff] %vm203, %v277
      %286 = vst.msk [vmem:[%s198 + $0x8] sm:$0xff] %vm203, %v282
      %s287 = smul.u32 2, %s18
      %p288 = scmp.lt.s32.totalorder %s17, 2
      %s289 = scalar_select %p288, %s17, 2
      %p290 = scmp.lt.s32.totalorder %s287, 1
      %s291 = scalar_select %p290, %s287, 1
      %s292 = smul.addr %s289, 2
      %s293 = sadd.s32 %s291, %s292
      %s294 = smul.addr %s293, 8
      %s295 = scalar_lea.vmem %s2, %s294
      // Predicated region
      $region29: #{tpu_custom_call.1} parent=27 // pred_check
        %p296 = pneg %p99
      $region30: #{tpu_custom_call.1} parent=27 // pred_check_branch
        %298 = sbr.rel (%p296) target = $region32
      $region31: #{tpu_custom_call.1} parent=27 // pred_region
        %s299 = smul.u32 2, %s18
      $region32: #{tpu_custom_call.1} parent=27 // pred_fallthru
        _
    $region28: #{tpu_custom_call.1} parent=5 // pred_fallthru
      _
    %p300 = scmp.le.s32.totalorder 2, %s8
    // Predicated region
    $region33: #{tpu_custom_call.1} parent=5 // pred_check
      %p301 = pneg %p300
    $region34: #{tpu_custom_call.1} parent=5 // pred_check_branch
      %303 = sbr.rel (%p301) target = $region36
    $region35: #{tpu_custom_call.1} parent=5 // pred_region
      %s304 = ssub.s32 %s8, 2
      // Predicated region
      $region37: #{tpu_custom_call.1} parent=35 // pred_check
        %p305 = pneg %p105
      $region38: #{tpu_custom_call.1} parent=35 // pred_check_branch
        %307 = sbr.rel (%p305) target = $region40
      $region39: #{tpu_custom_call.1} parent=35 // pred_region
        %s308 = smul.u32 2, %s20
        %p309 = scmp.lt.s32.totalorder %s19, 2
        %s310 = scalar_select %p309, %s19, 2
        %p311 = scmp.lt.s32.totalorder %s308, 1
        %s312 = scalar_select %p311, %s308, 1
        %s313 = smul.addr %s310, 2
        %s314 = sadd.s32 %s312, %s313
        %s315 = smul.addr %s314, 8
        %s316 = scalar_lea.vmem %s2, %s315
      $region40: #{tpu_custom_call.1} parent=35 // pred_fallthru
        _
    $region36: #{tpu_custom_call.1} parent=5 // pred_fallthru
      _
  $region6: #{tpu_custom_call.1} parent=0 // loop_footer
    %s12 = sadd.s32 1, %s8
  $region7: #{tpu_custom_call.1} parent=0 // loop_footer_branch
    %7 = sbr.rel target = $region3
  $region8: #{tpu_custom_call.1} parent=0 // loop_exit
    _

</llo_original>
